<compile_context>
chip_gen: v6e
topology: v6e:2x2x1
jax: 0.10.0
libtpu: 0.0.40
codegen_flags: <defaults>
</compile_context>

<pallas_src>
import math
from functools import partial

import jax
import jax.numpy as jnp
from jax.experimental import pallas as pl
from jax.experimental.pallas import tpu as pltpu


_TM_PREF = 512     # M tile preference (sublane-quantized)
_TN_PREF = 1024    # N (vocab) tile preference, lane-dense output stores
_TK_MAX = 1536     # max K tile when splitting the reduction


def _round_up(x, m):
    return (x + m - 1) // m * m


def _cdiv(a, b):
    return -(-a // b)


def _choose_tile(dim, pref, quantum):
    return _round_up(dim, quantum) if dim <= pref else pref


def _choose_tk(kr):
    """Pick a 128-multiple K tile covering `kr` in nk chunks with minimal padding."""
    nk_min = _cdiv(kr, _TK_MAX)
    best_tk, best_pad = None, None
    for nk in range(nk_min, nk_min + 8):
        tk = _round_up(_cdiv(kr, nk), 128)
        pad = nk * tk - kr
        if best_pad is None or pad < best_pad:
            best_tk, best_pad = tk, pad
        if pad == 0:
            break
    return best_tk


def _default_vmem_budget():
    """Per-generation VMEM budget for choosing the full-K vs split-K path."""
    cap = None
    try:
        info = pltpu.get_tpu_info()
        cap = getattr(info, "vmem_capacity_bytes", None)
    except Exception:
        cap = None
    if not cap:
        cap = 64 << 20  # v7x has the smallest per-TC VMEM; safe fallback
    return min(int(cap * 0.6), 96 << 20)


# -------------------- kernels --------------------

def _proj_kernel_full_k(x_ref, w_ref, b_ref, o_ref):
    # x_ref: (tm, Kp); w_ref: (Kp, tn) [pre-transposed]; b_ref: (1, tn)
    a = x_ref[...]
    b = w_ref[...]
    if a.dtype != b.dtype:            # trace-time branch (e.g. bf16 weights)
        a = a.astype(b.dtype)
    acc = jnp.dot(a, b, preferred_element_type=jnp.float32)
    o_ref[...] = (acc + b_ref[...].astype(jnp.float32)).astype(o_ref.dtype)


def _proj_kernel_split_k(x_ref, w_ref, b_ref, o_ref, acc_ref):
    # K is the last ("arbitrary") grid axis; f32 VMEM accumulator.
    k = pl.program_id(2)

    @pl.when(k == 0)
    def _():
        acc_ref[...] = jnp.zeros_like(acc_ref)

    a = x_ref[...]
    b = w_ref[...]
    if a.dtype != b.dtype:
        a = a.astype(b.dtype)
    acc_ref[...] += jnp.dot(a, b, preferred_element_type=jnp.float32)

    @pl.when(k == pl.num_programs(2) - 1)
    def _():
        o_ref[...] = (acc_ref[...] + b_ref[...].astype(jnp.float32)
                      ).astype(o_ref.dtype)


# -------------------- load-time parameter preparation --------------------

def prepare_params(weight, bias, *, param_dtype=None, vmem_budget_bytes=None):
    """One-time preparation of nn.Linear params (call at load/init, NOT per step).

    weight: (vocab, d_model) PyTorch layout; bias: (vocab,).
    - transposes weight to (d_model, vocab) so the kernel does (tm,tk)@(tk,tn),
    - zero-pads vocab and d_model to tile multiples here (never per call),
    - optionally casts storage to `param_dtype` (e.g. jnp.bfloat16).
    """
    N, K = weight.shape
    assert bias.shape == (N,)
    if param_dtype is not None:
        weight = weight.astype(param_dtype)
        bias = bias.astype(param_dtype)

    budget = (_default_vmem_budget() if vmem_budget_bytes is None
              else int(vmem_budget_bytes))

    tn = _choose_tile(N, _TN_PREF, 128)
    kr = _round_up(K, 128)

    # Full-K if the double-buffered working set (worst-case f32, tm=_TM_PREF) fits.
    ws_full = 4 * (2 * _TM_PREF * kr + 2 * kr * tn + 2 * _TM_PREF * tn + 2 * tn)
    if ws_full <= budget:
        split_k = False
        tk = kr
        kp = kr
    else:
        split_k = True
        tk = _choose_tk(kr)
        kp = _round_up(kr, tk)

    npad = _round_up(N, tn)

    w_t = weight.T                                    # (K, N) — one-time transpose
    if (kp, npad) != (K, N):
        w_t = jnp.pad(w_t, ((0, kp - K), (0, npad - N)))
    b2d = bias.reshape(1, N)
    if npad != N:
        b2d = jnp.pad(b2d, ((0, 0), (0, npad - N)))

    return {"w_t": w_t, "b": b2d, "n": N, "k": K,
            "tn": tn, "tk": tk, "split_k": split_k}


# -------------------- forward --------------------

@partial(jax.jit, static_argnames=("n", "tn", "tk", "split_k"))
def _projection_impl(x2d, w_t, b2d, *, n, tn, tk, split_k):
    M, K = x2d.shape
    Kp, Np = w_t.shape

    tm = _choose_tile(M, _TM_PREF, 8)
    Mp = _round_up(M, tm)
    if (Mp, Kp) != (M, K):
        x2d = jnp.pad(x2d, ((0, Mp - M), (0, Kp - K)))   # x only; weight untouched

    grid_m = Mp // tm
    grid_n = Np // tn

    x_sz = jnp.dtype(x2d.dtype).itemsize
    w_sz = jnp.dtype(w_t.dtype).itemsize
    o_sz = x_sz

    tk_eff = Kp if not split_k else tk
    ws = (2 * tm * tk_eff * x_sz + 2 * tk_eff * tn * w_sz
          + 2 * tm * tn * o_sz + 2 * tn * w_sz)
    if split_k:
        ws += tm * tn * 4
    vmem_limit = int(ws + (16 << 20))     # working set + compiler-scratch headroom

    # True streamed bytes: weight re-streamed grid_m times, x re-streamed grid_n times.
    cost = pl.CostEstimate(
        flops=2 * M * K * n,
        transcendentals=0,
        bytes_accessed=int(Mp * Kp * x_sz * grid_n
                           + Kp * Np * w_sz * grid_m
                           + Np * w_sz * grid_m
                           + Mp * Np * o_sz),
    )

    if not split_k:
        out2d = pl.pallas_call(
            _proj_kernel_full_k,
            out_shape=jax.ShapeDtypeStruct((Mp, Np), x2d.dtype),
            grid_spec=pltpu.PrefetchScalarGridSpec(
                num_scalar_prefetch=0,
                grid=(grid_m, grid_n),
                in_specs=[
                    pl.BlockSpec((tm, Kp), lambda i, j: (i, 0)),   # x tile, reused over N sweep
                    pl.BlockSpec((Kp, tn), lambda i, j: (0, j)),   # contiguous weight strip
                    pl.BlockSpec((1, tn), lambda i, j: (0, j)),    # bias tile
                ],
                out_specs=pl.BlockSpec((tm, tn), lambda i, j: (i, j)),
            ),
            compiler_params=pltpu.CompilerParams(
                dimension_semantics=("parallel", "parallel"),
                vmem_limit_bytes=vmem_limit),
            cost_estimate=cost,
        )(x2d, w_t, b2d)
    else:
        grid_k = Kp // tk
        out2d = pl.pallas_call(
            _proj_kernel_split_k,
            out_shape=jax.ShapeDtypeStruct((Mp, Np), x2d.dtype),
            grid_spec=pltpu.PrefetchScalarGridSpec(
                num_scalar_prefetch=0,
                grid=(grid_m, grid_n, grid_k),
                in_specs=[
                    pl.BlockSpec((tm, tk), lambda i, j, k: (i, k)),
                    pl.BlockSpec((tk, tn), lambda i, j, k: (k, j)),
                    pl.BlockSpec((1, tn), lambda i, j, k: (0, j)),
                ],
                out_specs=pl.BlockSpec((tm, tn), lambda i, j, k: (i, j)),
                scratch_shapes=[pltpu.VMEM((tm, tn), jnp.float32)],
            ),
            compiler_params=pltpu.CompilerParams(
                dimension_semantics=("parallel", "parallel", "arbitrary"),
                vmem_limit_bytes=vmem_limit),
            cost_estimate=cost,
        )(x2d, w_t, b2d)

    return out2d[:M, :n]


def projection_layer(x, params):
    """Forward of nn.Linear(d_model, vocab_size): x (B,S,d_model) -> (B,S,vocab)."""
    B, S, K = x.shape
    assert K == params["k"]
    out2d = _projection_impl(
        x.reshape(B * S, K), params["w_t"], params["b"],
        n=params["n"], tn=params["tn"], tk=params["tk"],
        split_k=params["split_k"])
    return out2d.reshape(B, S, params["n"])


def init_params(key, d_model, vocab_size, dtype=jnp.float32):
    # Mimic torch.nn.Linear default init: U(-1/sqrt(fan_in), 1/sqrt(fan_in))
    kw, kb = jax.random.split(key)
    bound = 1.0 / math.sqrt(d_model)
    weight = jax.random.uniform(
        kw, (vocab_size, d_model), dtype=dtype, minval=-bound, maxval=bound)
    bias = jax.random.uniform(
        kb, (vocab_size,), dtype=dtype, minval=-bound, maxval=bound)
    return weight, bias


if __name__ == "__main__":
    key = jax.random.PRNGKey(0)

    # ---- small module-scale shapes; exercises the 2-D full-K path ----
    batch, seq, d_model, vocab_size = 2, 8, 32, 64
    kx, kp, key = jax.random.split(key, 3)
    x = jax.random.normal(kx, (batch, seq, d_model), dtype=jnp.float32)
    weight, bias = init_params(kp, d_model, vocab_size)
    params = prepare_params(weight, bias)

    out = jax.block_until_ready(projection_layer(x, params))
    ref = x @ weight.T + bias
    assert out.shape == (batch, seq, vocab_size)
    assert jnp.allclose(out, ref, atol=1e-4, rtol=1e-4)

    # ---- larger d_model; force the split-K accumulator path (no gross K pad) ----
    batch2, seq2, d_model2, vocab2 = 2, 16, 2560, 1024
    kx2, kp2, key = jax.random.split(key, 3)
    x2 = jax.random.normal(kx2, (batch2, seq2, d_model2), dtype=jnp.float32)
    w2, b2 = init_params(kp2, d_model2, vocab2)
    ref2 = x2 @ w2.T + b2

    params2 = prepare_params(w2, b2, vmem_budget_bytes=16 << 20)
    assert params2["split_k"]
    assert params2["tk"] * _cdiv(_round_up(d_model2, 128), params2["tk"]) == d_model2
    out2 = jax.block_until_ready(projection_layer(x2, params2))
    assert out2.shape == (batch2, seq2, vocab2)
    assert jnp.allclose(out2, ref2, atol=2e-2, rtol=2e-2)

    # ---- same shape, default per-generation budget (full-K where it fits) ----
    params3 = prepare_params(w2, b2)
    out3 = jax.block_until_ready(projection_layer(x2, params3))
    assert jnp.allclose(out3, ref2, atol=2e-2, rtol=2e-2)

    # ---- bf16-stored weight: halves the memory-bound weight stream ----
    params4 = prepare_params(w2, b2, param_dtype=jnp.bfloat16)
    out4 = jax.block_until_ready(projection_layer(x2, params4))
    ref4 = (x2 @ w2.astype(jnp.bfloat16).astype(jnp.float32).T
            + b2.astype(jnp.bfloat16).astype(jnp.float32))
    assert jnp.allclose(out4, ref4, atol=2e-2, rtol=2e-2)

    print("KERNEL_OK")
</pallas_src>

<mosaic_0001>
module attributes {stable_mosaic.version = 11 : i64} {
  func.func @_proj_kernel_full_k(%arg0: i32, %arg1: i32, %arg2: memref<16x128xf32, #tpu.memory_space<vmem>>, %arg3: memref<128x128xf32, #tpu.memory_space<vmem>>, %arg4: memref<1x128xf32, #tpu.memory_space<vmem>>, %arg5: memref<16x128xf32, #tpu.memory_space<vmem>>) attributes {dimension_semantics = [#tpu.dimension_semantics<parallel>, #tpu.dimension_semantics<parallel>], iteration_bounds = array<i64: 1, 1>, scalar_prefetch = 0 : i64, scratch_operands = 0 : i64, tpu.core_type = #tpu.core_type<tc>, window_params = [{transform_indices = @transform_0, window_bounds = array<i64: 16, 128>}, {transform_indices = @transform_1, window_bounds = array<i64: 128, 128>}, {transform_indices = @transform_2, window_bounds = array<i64: 1, 128>}, {transform_indices = @transform_3, window_bounds = array<i64: 16, 128>}]} {
    %c0 = arith.constant 0 : index
    %c0_0 = arith.constant 0 : index
    %0 = vector.load %arg2[%c0, %c0_0] : memref<16x128xf32, #tpu.memory_space<vmem>>, vector<16x128xf32>
    %c0_1 = arith.constant 0 : index
    %c0_2 = arith.constant 0 : index
    %1 = vector.load %arg3[%c0_1, %c0_2] : memref<128x128xf32, #tpu.memory_space<vmem>>, vector<128x128xf32>
    %cst = arith.constant dense<0.000000e+00> : vector<16x128xf32>
    %2 = tpu.matmul %0, %1, %cst {dimension_numbers = #tpu.dot_dimension_numbers<[1], [0], [0], [1], [0, 0, 1, 1], [], []>} : vector<16x128xf32>, vector<128x128xf32>, vector<16x128xf32> -> vector<16x128xf32>
    %c0_3 = arith.constant 0 : index
    %c0_4 = arith.constant 0 : index
    %3 = vector.load %arg4[%c0_3, %c0_4] : memref<1x128xf32, #tpu.memory_space<vmem>>, vector<1x128xf32>
    %4 = vector.broadcast %3 : vector<1x128xf32> to vector<16x128xf32>
    %5 = arith.addf %2, %4 : vector<16x128xf32>
    %c0_5 = arith.constant 0 : index
    %c0_6 = arith.constant 0 : index
    %6 = vector.load %arg5[%c0_5, %c0_6] : memref<16x128xf32, #tpu.memory_space<vmem>>, vector<16x128xf32>
    tpu.vector_store %arg5[%c0_5, %c0_6], %5 {strides = array<i32>} : memref<16x128xf32, #tpu.memory_space<vmem>>, vector<16x128xf32>,
    return
  }
  func.func @transform_0(%arg0: i32, %arg1: i32) -> (i32, i32) {
    %c0_i32 = arith.constant 0 : i32
    %c0_i32_0 = arith.constant 0 : i32
    return %arg0, %c0_i32 : i32, i32
  }
  func.func @transform_1(%arg0: i32, %arg1: i32) -> (i32, i32) {
    %c0_i32 = arith.constant 0 : i32
    %c0_i32_0 = arith.constant 0 : i32
    return %c0_i32, %arg1 : i32, i32
  }
  func.func @transform_2(%arg0: i32, %arg1: i32) -> (i32, i32) {
    %c0_i32 = arith.constant 0 : i32
    %c0_i32_0 = arith.constant 0 : i32
    return %c0_i32, %arg1 : i32, i32
  }
  func.func @transform_3(%arg0: i32, %arg1: i32) -> (i32, i32) {
    %c0_i32 = arith.constant 0 : i32
    return %arg0, %arg1 : i32, i32
  }
}

</mosaic_0001>

<llo_original>
// kernel: _projection_impl.1
$region0: #{_projection_impl.1}
  #allocation0 [shape = 'u32[]', space=smem, size = 0x4, offset = 0x4, fixed_abs, tag = 'smem constant byte address 0x4 - core index']
  #allocation1 [shape = 'u32[144,128]{1,0:T(1,128)}', space=vmem, size = 0x12000, scoped, tag = 'internal scratch']
  %s0 = inlined_call_operand.vmem [shape: f32[16,128], index: 0, kind: input, shape index: {}]
  %s1 = inlined_call_operand.hbm [shape: f32[128,128], index: 1, kind: input, shape index: {}]
  %s2 = inlined_call_operand.vmem [shape: f32[1,128], index: 2, kind: input, shape index: {}]
  %s3 = inlined_call_operand.hbm [shape: f32[16,128], index: 3, kind: output, shape index: {}]
  %s4 = sld [smem:[#allocation0]]
  $region26: #{_projection_impl.1} parent=0
    _
  %s6 = ssub.s32 1, %s4
  %s7 = scalar_select 0, %s6, %s4
  $region1: #{_projection_impl.1} parent=0
    #allocation2 [shape = 'u8[65536]{0}', space=vmem, size = 0x10000, scoped, tag = 'input window, operand 1, single buffered']
    #allocation3 [shape = 's32[1]{0}', space=sflag, size = 0x4, scoped, tag = 'scoped memory for _projection_impl.1']
    #allocation4 [shape = 's32[1]{0}', space=sflag, size = 0x4, scoped, tag = 'scoped memory for _projection_impl.1']
    #allocation5 [shape = 'u8[8192]{0}', space=vmem, size = 0x2000, scoped, tag = 'output window, operand 0, single buffered']
    %8 = vsyncpa [#allocation3], 0
    %9 = vsyncpa [#allocation4], 0
    // Predicated region
    $region2: #{_projection_impl.1} parent=1 // pred_check
      _
    $region3: #{_projection_impl.1} parent=1 // pred_check_branch
      %11 = sbr.rel (0) target = $region5
    $region4: #{_projection_impl.1} parent=1 // pred_region
      _
    $region5: #{_projection_impl.1} parent=1 // pred_fallthru
      _
    // Predicated region
    $region6: #{_projection_impl.1} parent=1 // pred_check
      _
    $region7: #{_projection_impl.1} parent=1 // pred_check_branch
      %13 = sbr.rel (0) target = $region9
    $region8: #{_projection_impl.1} parent=1 // pred_region
      %s15 = ssub.s32 2048, 2048
      %16 = vsyncadd [#allocation3], %s15
      %s17 = sshll.u32 [#allocation2], 4
      %s18 = int_to_ptr.vmem [resolvable:$true] %s17
      %23 = dma.hbm_to_vmem [thread:$0]  %s1, 2048, %s18, [#allocation3], 128, 128, 8
    $region9: #{_projection_impl.1} parent=1 // pred_fallthru
      _
    // Predicated region
    $region10: #{_projection_impl.1} parent=1 // pred_check
      _
    $region11: #{_projection_impl.1} parent=1 // pred_check_branch
      %25 = sbr.rel (0) target = $region13
    $region12: #{_projection_impl.1} parent=1 // pred_region
      _
    $region13: #{_projection_impl.1} parent=1 // pred_fallthru
      _
    // Predicated region
    $region14: #{_projection_impl.1} parent=1 // pred_check
      _
    $region15: #{_projection_impl.1} parent=1 // pred_check_branch
      %27 = sbr.rel (0) target = $region17
    $region16: #{_projection_impl.1} parent=1 // pred_region
      %28 = dma.done [#allocation3], 2048
    $region17: #{_projection_impl.1} parent=1 // pred_fallthru
      _
    %v29 = vld [vmem:[%s0] sm:$0xff]
    %v30 = vld [vmem:[%s0 + $0x8] sm:$0xff]
    %v31 = vld [vmem:[#allocation2] sm:$0xff]
    %v32 = vld [vmem:[#allocation2 + $0x8] sm:$0xff]
    %v33 = vld [vmem:[#allocation2 + $0x10] sm:$0xff]
    %v34 = vld [vmem:[#allocation2 + $0x18] sm:$0xff]
    %v35 = vld [vmem:[#allocation2 + $0x20] sm:$0xff]
    %v36 = vld [vmem:[#allocation2 + $0x28] sm:$0xff]
    %v37 = vld [vmem:[#allocation2 + $0x30] sm:$0xff]
    %v38 = vld [vmem:[#allocation2 + $0x38] sm:$0xff]
    %v39 = vld [vmem:[#allocation2 + $0x40] sm:$0xff]
    %v40 = vld [vmem:[#allocation2 + $0x48] sm:$0xff]
    %v41 = vld [vmem:[#allocation2 + $0x50] sm:$0xff]
    %v42 = vld [vmem:[#allocation2 + $0x58] sm:$0xff]
    %v43 = vld [vmem:[#allocation2 + $0x60] sm:$0xff]
    %v44 = vld [vmem:[#allocation2 + $0x68] sm:$0xff]
    %v45 = vld [vmem:[#allocation2 + $0x70] sm:$0xff]
    %v46 = vld [vmem:[#allocation2 + $0x78] sm:$0xff]
    %v47 = vld [vmem:[%s2] sm:$0x1]
    %v49 = vlaneseq
    %v50 = vshrl.u32 %v49, 7
    %v51 = vsub.s32 0, %v50
    %v52 = vrot.slane %v47, %v51
    %54 = vmatprep.subr.mxu0 0.0
    %55 = vmatpush1.msra.mxu0 %v46
    %56 = vmatprep.subr.mxu0 0.0
    %57 = vmatpush1.msra.mxu0 %v45
    %58 = vmatprep.subr.mxu0 0.0
    %59 = vmatpush1.msra.mxu0 %v44
    %60 = vmatprep.subr.mxu0 0.0
    %61 = vmatpush1.msra.mxu0 %v43
    %62 = vmatprep.subr.mxu0 0.0
    %63 = vmatpush1.msra.mxu0 %v42
    %64 = vmatprep.subr.mxu0 0.0
    %65 = vmatpush1.msra.mxu0 %v41
    %66 = vmatprep.subr.mxu0 0.0
    %67 = vmatpush1.msra.mxu0 %v40
    %68 = vmatprep.subr.mxu0 0.0
    %69 = vmatpush1.msra.mxu0 %v39
    %70 = vmatprep.subr.mxu0 0.0
    %71 = vmatpush1.msra.mxu0 %v38
    %72 = vmatprep.subr.mxu0 0.0
    %73 = vmatpush1.msra.mxu0 %v37
    %74 = vmatprep.subr.mxu0 0.0
    %75 = vmatpush1.msra.mxu0 %v36
    %76 = vmatprep.subr.mxu0 0.0
    %77 = vmatpush1.msra.mxu0 %v35
    %78 = vmatprep.subr.mxu0 0.0
    %79 = vmatpush1.msra.mxu0 %v34
    %80 = vmatprep.subr.mxu0 0.0
    %81 = vmatpush1.msra.mxu0 %v33
    %82 = vmatprep.subr.mxu0 0.0
    %83 = vmatpush1.msra.mxu0 %v32
    %84 = vmatprep.subr.mxu0 0.0
    %85 = vmatpush1.msra.mxu0 %v31
    %86 = vmatprep.subr.mxu0 0.0
    %87 = vmatpush2.msra.mxu0 0.0
    %88 = vmatprep.subr.mxu0 0.0
    %89 = vmatpush2.msra.mxu0 0.0
    %90 = vmatprep.subr.mxu0 0.0
    %91 = vmatpush2.msra.mxu0 0.0
    %92 = vmatprep.subr.mxu0 0.0
    %93 = vmatpush2.msra.mxu0 0.0
    %94 = vmatprep.subr.mxu0 0.0
    %95 = vmatpush2.msra.mxu0 0.0
    %96 = vmatprep.subr.mxu0 0.0
    %97 = vmatpush2.msra.mxu0 0.0
    %98 = vmatprep.subr.mxu0 0.0
    %99 = vmatpush2.msra.mxu0 0.0
    %100 = vmatprep.subr.mxu0 0.0
    %101 = vmatpush2.msra.mxu0 0.0
    %102 = vmatprep.subr.mxu0 0.0
    %103 = vmatpush2.msra.mxu0 0.0
    %104 = vmatprep.subr.mxu0 0.0
    %105 = vmatpush2.msra.mxu0 0.0
    %106 = vmatprep.subr.mxu0 0.0
    %107 = vmatpush2.msra.mxu0 0.0
    %108 = vmatprep.subr.mxu0 0.0
    %109 = vmatpush2.msra.mxu0 0.0
    %110 = vmatprep.subr.mxu0 0.0
    %111 = vmatpush2.msra.mxu0 0.0
    %112 = vmatprep.subr.mxu0 0.0
    %113 = vmatpush2.msra.mxu0 0.0
    %114 = vmatprep.subr.mxu0 0.0
    %115 = vmatpush2.msra.mxu0 0.0
    %116 = vmatprep.subr.mxu0 0.0
    %117 = vmatpush2.msra.mxu0 0.0
    %118 = vmatprep.mubr.f32.mxu0 0.0
    %119 = vmatmul.mubr.f32.gmra.mxu0 %v29
    %v120 = vpop.f32.mrf.mxu0
    %v121 = vadd.f32 %v52, %v120
    %v122 = vpop.f32.mrf.mxu0
    %123 = vmatprep.mubr.f32.mxu0 0.0
    %124 = vmatmul.mubr.f32.gmra.mxu0 %v30
    %v125 = vpop.f32.mrf.mxu0
    %v126 = vadd.f32 %v52, %v125
    %v127 = vpop.f32.mrf.mxu0
    %128 = vdwg.mxu0
    %129 = vst [vmem:[#allocation5] sm:$0xff] %v121
    %130 = vst [vmem:[#allocation5 + $0x8] sm:$0xff] %v126
    // Predicated region
    $region18: #{_projection_impl.1} parent=1 // pred_check
      _
    $region19: #{_projection_impl.1} parent=1 // pred_check_branch
      %132 = sbr.rel (0) target = $region21
    $region20: #{_projection_impl.1} parent=1 // pred_region
      %s134 = ssub.s32 256, 256
      %135 = vsyncadd [#allocation4], %s134
      %s136 = sshll.u32 [#allocation5], 4
      %s137 = int_to_ptr.vmem [resolvable:$true] %s136
      %142 = dma.vmem_to_hbm [thread:$0]  %s137, 256, %s3, [#allocation4], 128, 128, 8
    $region21: #{_projection_impl.1} parent=1 // pred_fallthru
      _
    // Predicated region
    $region22: #{_projection_impl.1} parent=1 // pred_check
      _
    $region23: #{_projection_impl.1} parent=1 // pred_check_branch
      %144 = sbr.rel (0) target = $region25
    $region24: #{_projection_impl.1} parent=1 // pred_region
      %145 = dma.done [#allocation4], 256
    $region25: #{_projection_impl.1} parent=1 // pred_fallthru
      _
    %146 = vsyncpa [#allocation3], 1
    %147 = vsyncpa [#allocation4], 1

</llo_original>
